<compile_context>
chip_gen: v7x
topology: tpu7x:2x2x1
jax: 0.10.0
libtpu: 0.0.40
codegen_flags: <defaults>
</compile_context>

<pallas_src>
import functools

import jax
import jax.numpy as jnp
from jax.experimental import pallas as pl
from jax.experimental.pallas import tpu as pltpu


def _round_up(n, m):
    return (n + m - 1) // m * m


def _supports_bf16_elementwise():
    # v6e / v7x VPUs have bf16 VALUs; v5e (and older) do not, so bf16
    # elementwise there would be emulated.  Any detection failure -> f32.
    try:
        kind = jax.devices()[0].device_kind.lower()
    except Exception:
        return False
    return any(tag in kind for tag in ("v6", "v7", "7x"))


def mlp_kernel(xt_ref,
               w1_ref, b1_ref,
               w2_ref, b2_ref,
               w3_ref, b3_ref,
               w4_ref, b4_ref,
               o_ref, *, act_dtype):
    # Activations are [features, TILE_B] with batch on the lane axis, so every
    # intermediate and the (1, TILE_B) output are lane-dense (unmasked vst).
    xt = xt_ref[...]                                            # (16, TILE_B) bf16

    # fc1..fc3 + ReLU: bf16 MXU operands, f32 accumulation inside the MXU.
    # act_dtype is bf16 on v6e/v7x (bf16 VPU) and f32 on v5e and older.
    h1 = jnp.dot(w1_ref[...], xt, preferred_element_type=act_dtype)
    h1 = jnp.maximum(h1 + b1_ref[...], 0.0).astype(jnp.bfloat16)   # (64, TILE_B)

    h2 = jnp.dot(w2_ref[...], h1, preferred_element_type=act_dtype)
    h2 = jnp.maximum(h2 + b2_ref[...], 0.0).astype(jnp.bfloat16)   # (128, TILE_B)

    h3 = jnp.dot(w3_ref[...], h2, preferred_element_type=act_dtype)
    h3 = jnp.maximum(h3 + b3_ref[...], 0.0)                        # (64, TILE_B)

    # fc4 (64 -> 1): VPU multiply + sublane reduce (f32 accumulation) instead
    # of an N=1 MXU matmul; the result is already lane-dense.
    out = jnp.sum((h3 * w4_ref[...]).astype(jnp.float32), axis=0, keepdims=True)
    o_ref[...] = (out + b4_ref[...]).astype(o_ref.dtype)           # (1, TILE_B)


def _choose_tiling(batch, *, tile_cap=4096, target_tiles=2):
    """Pick (tile_b, padded_b, grid) for the 1-D batch grid.

    padded_b only rounds the batch up to the 128-lane width; the last grid
    step may map to a partial tile (Pallas masks out-of-bounds columns), so
    no DMA/MXU work is wasted padding the batch up to a multiple of tile_b.
    """
    padded_b = _round_up(max(batch, 1), 128)
    n_chunks = padded_b // 128
    # Enough tiles to (a) respect the VMEM-friendly tile cap and (b) give the
    # two TensorCores of v7x/v5p/v4 something to split ("parallel" grid axis);
    # an even tile count keeps the megacore split balanced.
    n = min(n_chunks, max(target_tiles, pl.cdiv(padded_b, tile_cap)))
    if n > 1 and n % 2:
        n = min(n_chunks, n + 1)
    tile_b = 128 * pl.cdiv(n_chunks, n)
    grid_n = pl.cdiv(padded_b, tile_b)
    return tile_b, padded_b, grid_n


def mlp_forward(x, params, *, tile_b=None, tile_cap=4096):
    """x: [batch, 14] f32.  params: PyTorch-layout (W[out,in], b[out]) per layer."""
    (w1, b1), (w2, b2), (w3, b3), (w4, b4) = params
    batch, in_f = x.shape
    d1, d2, d3 = w1.shape[0], w2.shape[0], w3.shape[0]          # 64, 128, 64

    if tile_b is None:
        tile_b, padded_b, grid_n = _choose_tiling(batch, tile_cap=tile_cap)
    else:
        assert tile_b % 128 == 0 and tile_b > 0, "tile_b must be a positive multiple of 128"
        padded_b = _round_up(max(batch, 1), 128)
        tile_b = min(tile_b, padded_b)
        grid_n = pl.cdiv(padded_b, tile_b)

    k_pad = _round_up(in_f, 8)                                  # 14 -> 16 (zero pad, exact)
    act_dtype = jnp.bfloat16 if _supports_bf16_elementwise() else jnp.float32

    # --- wrapper-side layout plumbing: one fused cast+transpose+pad pass. ---
    # For best end-to-end throughput the producer should emit x already as
    # bf16 [14, batch]; this pre-pass then disappears entirely.
    xt = jnp.pad(x.astype(jnp.bfloat16).T,
                 ((0, k_pad - in_f), (0, padded_b - batch)))

    w1p = jnp.pad(w1.astype(jnp.bfloat16), ((0, 0), (0, k_pad - in_f)))
    w2b = w2.astype(jnp.bfloat16)
    w3b = w3.astype(jnp.bfloat16)
    w4c = w4.reshape(d3, 1).astype(act_dtype)                   # (64, 1) VPU tail weight
    b1c = b1.reshape(d1, 1).astype(act_dtype)
    b2c = b2.reshape(d2, 1).astype(act_dtype)
    b3c = b3.reshape(d3, 1).astype(act_dtype)
    b4c = b4.reshape(1, 1).astype(jnp.float32)

    flops = 2 * grid_n * tile_b * (k_pad * d1 + d1 * d2 + d2 * d3 + d3)
    bytes_accessed = int(xt.size * 2
                         + (w1p.size + w2b.size + w3b.size) * 2
                         + (w4c.size + b1c.size + b2c.size + b3c.size + 1) * 4
                         + padded_b * 4)

    out = pl.pallas_call(
        functools.partial(mlp_kernel, act_dtype=act_dtype),
        out_shape=jax.ShapeDtypeStruct((1, padded_b), jnp.float32),
        grid=(grid_n,),
        in_specs=[
            pl.BlockSpec((k_pad, tile_b), lambda i: (0, i)),    # x^T tile (batch on lanes)
            pl.BlockSpec((d1, k_pad), lambda i: (0, 0)),        # weights/biases: VMEM-resident
            pl.BlockSpec((d1, 1), lambda i: (0, 0)),
            pl.BlockSpec((d2, d1), lambda i: (0, 0)),
            pl.BlockSpec((d2, 1), lambda i: (0, 0)),
            pl.BlockSpec((d3, d2), lambda i: (0, 0)),
            pl.BlockSpec((d3, 1), lambda i: (0, 0)),
            pl.BlockSpec((d3, 1), lambda i: (0, 0)),
            pl.BlockSpec((1, 1), lambda i: (0, 0)),
        ],
        out_specs=pl.BlockSpec((1, tile_b), lambda i: (0, i)),  # lane-dense output
        compiler_params=pltpu.CompilerParams(
            dimension_semantics=("parallel",)),                 # shards grid across 2 TCs (v7x)
        cost_estimate=pl.CostEstimate(flops=flops, transcendentals=0,
                                      bytes_accessed=bytes_accessed),
    )(xt, w1p, b1c, w2b, b2c, w3b, b3c, w4c, b4c)

    # Back to the module's (batch, 1) output.
    return out[0, :batch].reshape(batch, 1)


def init_linear(key, in_f, out_f):
    # Matches torch.nn.Linear default init: U(-1/sqrt(in_f), 1/sqrt(in_f)).
    # Stored in PyTorch layout: weight (out_f, in_f), bias (out_f,).
    kw, kb = jax.random.split(key)
    bound = 1.0 / jnp.sqrt(jnp.float32(in_f))
    w = jax.random.uniform(kw, (out_f, in_f), jnp.float32, -bound, bound)
    b = jax.random.uniform(kb, (out_f,), jnp.float32, -bound, bound)
    return w, b


if __name__ == "__main__":
    key = jax.random.PRNGKey(0)
    k_x, k1, k2, k3, k4 = jax.random.split(key, 5)

    params = (
        init_linear(k1, 14, 64),
        init_linear(k2, 64, 128),
        init_linear(k3, 128, 64),
        init_linear(k4, 64, 1),
    )

    def reference(inp):  # f32 reference, same math (PyTorch layout: y = x @ W.T + b)
        r = inp
        for i, (w, b) in enumerate(params):
            r = r @ w.T + b
            if i < 3:
                r = jnp.maximum(r, 0.0)
        return r

    # Small shape from the module spec (features = 14).
    x = jax.random.normal(k_x, (8, 14), dtype=jnp.float32)
    out = jax.block_until_ready(mlp_forward(x, params))
    assert out.shape == (8, 1)
    # bf16 MXU operands -> loosened tolerance (f32 accumulation keeps it tight).
    assert jnp.allclose(out, reference(x), atol=5e-2, rtol=5e-2), (
        f"max abs err {jnp.max(jnp.abs(out - reference(x)))}")

    # Second check exercising the multi-step grid with a partial last tile
    # (batch 300 -> padded 384, tile_b 256, grid 2, last block half OOB/masked).
    x_big = jax.random.normal(k_x, (300, 14), dtype=jnp.float32)
    out_big = jax.block_until_ready(mlp_forward(x_big, params))
    assert out_big.shape == (300, 1)
    assert jnp.allclose(out_big, reference(x_big), atol=5e-2, rtol=5e-2), (
        f"max abs err {jnp.max(jnp.abs(out_big - reference(x_big)))}")

    print("KERNEL_OK")
</pallas_src>

<mosaic_0001>
module attributes {stable_mosaic.version = 11 : i64} {
  func.func @mlp_kernel(%arg0: i32, %arg1: memref<16x128xbf16, #tpu.memory_space<vmem>>, %arg2: memref<64x16xbf16, #tpu.memory_space<vmem>>, %arg3: memref<64x1xf32, #tpu.memory_space<vmem>>, %arg4: memref<128x64xbf16, #tpu.memory_space<vmem>>, %arg5: memref<128x1xf32, #tpu.memory_space<vmem>>, %arg6: memref<64x128xbf16, #tpu.memory_space<vmem>>, %arg7: memref<64x1xf32, #tpu.memory_space<vmem>>, %arg8: memref<64x1xf32, #tpu.memory_space<vmem>>, %arg9: memref<1x1xf32, #tpu.memory_space<vmem>>, %arg10: memref<1x128xf32, #tpu.memory_space<vmem>>) attributes {dimension_semantics = [#tpu.dimension_semantics<parallel>], iteration_bounds = array<i64: 1>, scalar_prefetch = 0 : i64, scratch_operands = 0 : i64, tpu.core_type = #tpu.core_type<tc>, window_params = [{transform_indices = @transform_0, window_bounds = array<i64: 16, 128>}, {pipeline_mode = #tpu.pipeline_mode<synchronous>, transform_indices = @transform_1, window_bounds = array<i64: 64, 16>}, {pipeline_mode = #tpu.pipeline_mode<synchronous>, transform_indices = @transform_2, window_bounds = array<i64: 64, 1>}, {pipeline_mode = #tpu.pipeline_mode<synchronous>, transform_indices = @transform_3, window_bounds = array<i64: 128, 64>}, {pipeline_mode = #tpu.pipeline_mode<synchronous>, transform_indices = @transform_4, window_bounds = array<i64: 128, 1>}, {pipeline_mode = #tpu.pipeline_mode<synchronous>, transform_indices = @transform_5, window_bounds = array<i64: 64, 128>}, {pipeline_mode = #tpu.pipeline_mode<synchronous>, transform_indices = @transform_6, window_bounds = array<i64: 64, 1>}, {pipeline_mode = #tpu.pipeline_mode<synchronous>, transform_indices = @transform_7, window_bounds = array<i64: 64, 1>}, {pipeline_mode = #tpu.pipeline_mode<synchronous>, transform_indices = @transform_8, window_bounds = array<i64: 1, 1>}, {transform_indices = @transform_9, window_bounds = array<i64: 1, 128>}]} {
    %c0 = arith.constant 0 : index
    %c0_0 = arith.constant 0 : index
    %0 = vector.load %arg1[%c0, %c0_0] : memref<16x128xbf16, #tpu.memory_space<vmem>>, vector<16x128xbf16>
    %c0_1 = arith.constant 0 : index
    %c0_2 = arith.constant 0 : index
    %1 = vector.load %arg2[%c0_1, %c0_2] : memref<64x16xbf16, #tpu.memory_space<vmem>>, vector<64x16xbf16>
    %cst = arith.constant dense<0.000000e+00> : vector<64x128xf32>
    %2 = tpu.matmul %1, %0, %cst {dimension_numbers = #tpu.dot_dimension_numbers<[1], [0], [0], [1], [0, 0, 1, 1], [], []>} : vector<64x16xbf16>, vector<16x128xbf16>, vector<64x128xf32> -> vector<64x128xf32>
    %c0_3 = arith.constant 0 : index
    %c0_4 = arith.constant 0 : index
    %3 = vector.load %arg3[%c0_3, %c0_4] : memref<64x1xf32, #tpu.memory_space<vmem>>, vector<64x1xf32>
    %4 = vector.broadcast %3 : vector<64x1xf32> to vector<64x128xf32>
    %5 = arith.addf %2, %4 : vector<64x128xf32>
    %cst_5 = arith.constant 0.000000e+00 : f32
    %6 = vector.broadcast %cst_5 : f32 to vector<64x128xf32>
    %7 = arith.maximumf %5, %6 : vector<64x128xf32>
    %8 = arith.truncf %7 : vector<64x128xf32> to vector<64x128xbf16>
    %c0_6 = arith.constant 0 : index
    %c0_7 = arith.constant 0 : index
    %9 = vector.load %arg4[%c0_6, %c0_7] : memref<128x64xbf16, #tpu.memory_space<vmem>>, vector<128x64xbf16>
    %cst_8 = arith.constant dense<0.000000e+00> : vector<128x128xf32>
    %10 = tpu.matmul %9, %8, %cst_8 {dimension_numbers = #tpu.dot_dimension_numbers<[1], [0], [0], [1], [0, 0, 1, 1], [], []>} : vector<128x64xbf16>, vector<64x128xbf16>, vector<128x128xf32> -> vector<128x128xf32>
    %c0_9 = arith.constant 0 : index
    %c0_10 = arith.constant 0 : index
    %11 = vector.load %arg5[%c0_9, %c0_10] : memref<128x1xf32, #tpu.memory_space<vmem>>, vector<128x1xf32>
    %12 = vector.broadcast %11 : vector<128x1xf32> to vector<128x128xf32>
    %13 = arith.addf %10, %12 : vector<128x128xf32>
    %cst_11 = arith.constant 0.000000e+00 : f32
    %14 = vector.broadcast %cst_11 : f32 to vector<128x128xf32>
    %15 = arith.maximumf %13, %14 : vector<128x128xf32>
    %16 = arith.truncf %15 : vector<128x128xf32> to vector<128x128xbf16>
    %c0_12 = arith.constant 0 : index
    %c0_13 = arith.constant 0 : index
    %17 = vector.load %arg6[%c0_12, %c0_13] : memref<64x128xbf16, #tpu.memory_space<vmem>>, vector<64x128xbf16>
    %cst_14 = arith.constant dense<0.000000e+00> : vector<64x128xf32>
    %18 = tpu.matmul %17, %16, %cst_14 {dimension_numbers = #tpu.dot_dimension_numbers<[1], [0], [0], [1], [0, 0, 1, 1], [], []>} : vector<64x128xbf16>, vector<128x128xbf16>, vector<64x128xf32> -> vector<64x128xf32>
    %c0_15 = arith.constant 0 : index
    %c0_16 = arith.constant 0 : index
    %19 = vector.load %arg7[%c0_15, %c0_16] : memref<64x1xf32, #tpu.memory_space<vmem>>, vector<64x1xf32>
    %20 = vector.broadcast %19 : vector<64x1xf32> to vector<64x128xf32>
    %21 = arith.addf %18, %20 : vector<64x128xf32>
    %cst_17 = arith.constant 0.000000e+00 : f32
    %22 = vector.broadcast %cst_17 : f32 to vector<64x128xf32>
    %23 = arith.maximumf %21, %22 : vector<64x128xf32>
    %c0_18 = arith.constant 0 : index
    %c0_19 = arith.constant 0 : index
    %24 = vector.load %arg8[%c0_18, %c0_19] : memref<64x1xf32, #tpu.memory_space<vmem>>, vector<64x1xf32>
    %25 = vector.broadcast %24 : vector<64x1xf32> to vector<64x128xf32>
    %26 = arith.mulf %23, %25 : vector<64x128xf32>
    %cst_20 = arith.constant dense<0.000000e+00> : vector<128xf32>
    %27 = vector.multi_reduction <add>, %26, %cst_20 [0] : vector<64x128xf32> to vector<128xf32>
    %28 = vector.shape_cast %27 : vector<128xf32> to vector<1x128xf32>
    %c0_21 = arith.constant 0 : index
    %c0_22 = arith.constant 0 : index
    %29 = vector.load %arg9[%c0_21, %c0_22] : memref<1x1xf32, #tpu.memory_space<vmem>>, vector<1x1xf32>
    %30 = vector.broadcast %29 : vector<1x1xf32> to vector<1x128xf32>
    %31 = arith.addf %28, %30 : vector<1x128xf32>
    %c0_23 = arith.constant 0 : index
    %c0_24 = arith.constant 0 : index
    %32 = vector.load %arg10[%c0_23, %c0_24] : memref<1x128xf32, #tpu.memory_space<vmem>>, vector<1x128xf32>
    tpu.vector_store %arg10[%c0_23, %c0_24], %31 {strides = array<i32>} : memref<1x128xf32, #tpu.memory_space<vmem>>, vector<1x128xf32>,
    return
  }
  func.func @transform_0(%arg0: i32) -> (i32, i32) {
    %c0_i32 = arith.constant 0 : i32
    %c0_i32_0 = arith.constant 0 : i32
    return %c0_i32, %arg0 : i32, i32
  }
  func.func @transform_1(%arg0: i32) -> (i32, i32) {
    %c0_i32 = arith.constant 0 : i32
    %c0_i32_0 = arith.constant 0 : i32
    %c0_i32_1 = arith.constant 0 : i32
    return %c0_i32, %c0_i32_0 : i32, i32
  }
  func.func @transform_2(%arg0: i32) -> (i32, i32) {
    %c0_i32 = arith.constant 0 : i32
    %c0_i32_0 = arith.constant 0 : i32
    %c0_i32_1 = arith.constant 0 : i32
    return %c0_i32, %c0_i32_0 : i32, i32
  }
  func.func @transform_3(%arg0: i32) -> (i32, i32) {
    %c0_i32 = arith.constant 0 : i32
    %c0_i32_0 = arith.constant 0 : i32
    %c0_i32_1 = arith.constant 0 : i32
    return %c0_i32, %c0_i32_0 : i32, i32
  }
  func.func @transform_4(%arg0: i32) -> (i32, i32) {
    %c0_i32 = arith.constant 0 : i32
    %c0_i32_0 = arith.constant 0 : i32
    %c0_i32_1 = arith.constant 0 : i32
    return %c0_i32, %c0_i32_0 : i32, i32
  }
  func.func @transform_5(%arg0: i32) -> (i32, i32) {
    %c0_i32 = arith.constant 0 : i32
    %c0_i32_0 = arith.constant 0 : i32
    %c0_i32_1 = arith.constant 0 : i32
    return %c0_i32, %c0_i32_0 : i32, i32
  }
  func.func @transform_6(%arg0: i32) -> (i32, i32) {
    %c0_i32 = arith.constant 0 : i32
    %c0_i32_0 = arith.constant 0 : i32
    %c0_i32_1 = arith.constant 0 : i32
    return %c0_i32, %c0_i32_0 : i32, i32
  }
  func.func @transform_7(%arg0: i32) -> (i32, i32) {
    %c0_i32 = arith.constant 0 : i32
    %c0_i32_0 = arith.constant 0 : i32
    %c0_i32_1 = arith.constant 0 : i32
    return %c0_i32, %c0_i32_0 : i32, i32
  }
  func.func @transform_8(%arg0: i32) -> (i32, i32) {
    %c0_i32 = arith.constant 0 : i32
    %c0_i32_0 = arith.constant 0 : i32
    %c0_i32_1 = arith.constant 0 : i32
    return %c0_i32, %c0_i32_0 : i32, i32
  }
  func.func @transform_9(%arg0: i32) -> (i32, i32) {
    %c0_i32 = arith.constant 0 : i32
    %c0_i32_0 = arith.constant 0 : i32
    return %c0_i32, %arg0 : i32, i32
  }
}

</mosaic_0001>

<llo_original>
// kernel: tpu_custom_call.1
$region0: #{tpu_custom_call.1}
  #allocation0 [shape = 'u32[]', space=smem, size = 0x4, offset = 0x4, fixed_abs, tag = 'smem constant byte address 0x4 - core index']
  #allocation1 [shape = 'u32[144,128]{1,0:T(1,128)}', space=vmem, size = 0x12000, scoped, tag = 'internal scratch']
  #allocation2 [shape = 'f32[1,1]{1,0:T(1,128)S(1)}', space=vmem, size = 0x200, scoped, tag = 'scoped memory for tpu_custom_call.1']
  %s0 = inlined_call_operand.vmem [shape: bf16[16,128], index: 0, kind: input, shape index: {}]
  %s1 = inlined_call_operand.vmem [shape: bf16[64,16], index: 1, kind: input, shape index: {}]
  %s2 = inlined_call_operand.vmem [shape: f32[64,1], index: 2, kind: input, shape index: {}]
  %s3 = inlined_call_operand.vmem [shape: bf16[128,64], index: 3, kind: input, shape index: {}]
  %s4 = inlined_call_operand.vmem [shape: f32[128,1], index: 4, kind: input, shape index: {}]
  %s5 = inlined_call_operand.vmem [shape: bf16[64,128], index: 5, kind: input, shape index: {}]
  %s6 = inlined_call_operand.vmem [shape: f32[64,1], index: 6, kind: input, shape index: {}]
  %s7 = inlined_call_operand.vmem [shape: f32[64,1], index: 7, kind: input, shape index: {}]
  %s8 = inlined_call_operand.<no memory space> [shape: f32[1,1], index: 8, kind: input, shape index: {}]
  %s9 = inlined_call_operand.hbm [shape: f32[1,128], index: 9, kind: output, shape index: {}]
  %s10 = sld [smem:[#allocation0]]
  $region46: #{tpu_custom_call.1} parent=0
    _
  %s12 = ssub.s32 1, %s10
  %s13 = scalar_select 0, %s12, %s10
  %v14 = vstv %s8
  %15 = vst [vmem:[#allocation2] sm:$0x1] %v14
  $region1: #{tpu_custom_call.1} parent=0
    #allocation3 [shape = 'u8[512]{0}', space=vmem, size = 0x400, scoped, tag = 'output window, operand 0, single buffered']
    #allocation4 [shape = 's32[1]{0}', space=sflag, size = 0x4, scoped, tag = 'scoped memory for tpu_custom_call.1']
    %16 = vsyncpa [#allocation4], 0
    // Predicated region
    $region2: #{tpu_custom_call.1} parent=1 // pred_check
      _
    $region3: #{tpu_custom_call.1} parent=1 // pred_check_branch
      %18 = sbr.rel (0) target = $region5
    $region4: #{tpu_custom_call.1} parent=1 // pred_region
      _
    $region5: #{tpu_custom_call.1} parent=1 // pred_fallthru
      _
    // Predicated region
    $region6: #{tpu_custom_call.1} parent=1 // pred_check
      _
    $region7: #{tpu_custom_call.1} parent=1 // pred_check_branch
      %20 = sbr.rel (0) target = $region9
    $region8: #{tpu_custom_call.1} parent=1 // pred_region
      _
    $region9: #{tpu_custom_call.1} parent=1 // pred_fallthru
      _
    // Predicated region
    $region10: #{tpu_custom_call.1} parent=1 // pred_check
      _
    $region11: #{tpu_custom_call.1} parent=1 // pred_check_branch
      %22 = sbr.rel (0) target = $region13
    $region12: #{tpu_custom_call.1} parent=1 // pred_region
      _
    $region13: #{tpu_custom_call.1} parent=1 // pred_fallthru
      _
    // Predicated region
    $region14: #{tpu_custom_call.1} parent=1 // pred_check
      _
    $region15: #{tpu_custom_call.1} parent=1 // pred_check_branch
      %24 = sbr.rel (0) target = $region17
    $region16: #{tpu_custom_call.1} parent=1 // pred_region
      _
    $region17: #{tpu_custom_call.1} parent=1 // pred_fallthru
      _
    // Predicated region
    $region18: #{tpu_custom_call.1} parent=1 // pred_check
      _
    $region19: #{tpu_custom_call.1} parent=1 // pred_check_branch
      %26 = sbr.rel (0) target = $region21
    $region20: #{tpu_custom_call.1} parent=1 // pred_region
      _
    $region21: #{tpu_custom_call.1} parent=1 // pred_fallthru
      _
    // Predicated region
    $region22: #{tpu_custom_call.1} parent=1 // pred_check
      _
    $region23: #{tpu_custom_call.1} parent=1 // pred_check_branch
      %28 = sbr.rel (0) target = $region25
    $region24: #{tpu_custom_call.1} parent=1 // pred_region
      _
    $region25: #{tpu_custom_call.1} parent=1 // pred_fallthru
      _
    // Predicated region
    $region26: #{tpu_custom_call.1} parent=1 // pred_check
      _
    $region27: #{tpu_custom_call.1} parent=1 // pred_check_branch
      %30 = sbr.rel (0) target = $region29
    $region28: #{tpu_custom_call.1} parent=1 // pred_region
      _
    $region29: #{tpu_custom_call.1} parent=1 // pred_fallthru
      _
    // Predicated region
    $region30: #{tpu_custom_call.1} parent=1 // pred_check
      _
    $region31: #{tpu_custom_call.1} parent=1 // pred_check_branch
      %32 = sbr.rel (0) target = $region33
    $region32: #{tpu_custom_call.1} parent=1 // pred_region
      _
    $region33: #{tpu_custom_call.1} parent=1 // pred_fallthru
      _
    // Predicated region
    $region34: #{tpu_custom_call.1} parent=1 // pred_check
      _
    $region35: #{tpu_custom_call.1} parent=1 // pred_check_branch
      %34 = sbr.rel (0) target = $region37
    $region36: #{tpu_custom_call.1} parent=1 // pred_region
      _
    $region37: #{tpu_custom_call.1} parent=1 // pred_fallthru
      _
    %v36 = vld [vmem:[%s0] sm:$0xf]
    %v37 = vld [vmem:[%s0 + $0x4] sm:$0xf]
    %v38 = vld [vmem:[%s1] sm:$0xf]
    %v39 = vld [vmem:[%s1 + $0x4] sm:$0xf]
    %v40 = vld [vmem:[%s1 + $0x8] sm:$0xf]
    %v41 = vld [vmem:[%s1 + $0xc] sm:$0xf]
    %v42 = vld [vmem:[%s1 + $0x10] sm:$0xf]
    %v43 = vld [vmem:[%s1 + $0x14] sm:$0xf]
    %v44 = vld [vmem:[%s1 + $0x18] sm:$0xf]
    %v45 = vld [vmem:[%s1 + $0x1c] sm:$0xf]
    %v46 = vld [vmem:[%s2] sm:$0xff]
    %v47 = vld [vmem:[%s2 + $0x8] sm:$0xff]
    %v48 = vld [vmem:[%s2 + $0x10] sm:$0xff]
    %v49 = vld [vmem:[%s2 + $0x18] sm:$0xff]
    %v50 = vld [vmem:[%s2 + $0x20] sm:$0xff]
    %v51 = vld [vmem:[%s2 + $0x28] sm:$0xff]
    %v52 = vld [vmem:[%s2 + $0x30] sm:$0xff]
    %v53 = vld [vmem:[%s2 + $0x38] sm:$0xff]
    %55 = vset.pattern.permute.xlu0 0
    %56 = vperm.xlu0 %55, %v46
    %v57 = vpop.permute.xlu0 %56
    %60 = vset.pattern.permute.xlu0 0
    %61 = vperm.xlu0 %60, %v47
    %v62 = vpop.permute.xlu0 %61
    %65 = vset.pattern.permute.xlu0 0
    %66 = vperm.xlu0 %65, %v48
    %v67 = vpop.permute.xlu0 %66
    %70 = vset.pattern.permute.xlu0 0
    %71 = vperm.xlu0 %70, %v49
    %v72 = vpop.permute.xlu0 %71
    %75 = vset.pattern.permute.xlu0 0
    %76 = vperm.xlu0 %75, %v50
    %v77 = vpop.permute.xlu0 %76
    %80 = vset.pattern.permute.xlu0 0
    %81 = vperm.xlu0 %80, %v51
    %v82 = vpop.permute.xlu0 %81
    %85 = vset.pattern.permute.xlu0 0
    %86 = vperm.xlu0 %85, %v52
    %v87 = vpop.permute.xlu0 %86
    %90 = vset.pattern.permute.xlu0 0
    %91 = vperm.xlu0 %90, %v53
    %v92 = vpop.permute.xlu0 %91
    %v102 = vunpack.c.l.b16 %v38
    %v103 = vunpack.c.l.b16 %v39
    %v104 = vunpack.c.l.b16 %v40
    %v105 = vunpack.c.l.b16 %v41
    %v106 = vunpack.c.l.b16 %v42
    %v107 = vunpack.c.l.b16 %v43
    %v108 = vunpack.c.l.b16 %v44
    %v109 = vunpack.c.l.b16 %v45
    %v110 = vpack.c.b16 %v103, %v102
    %v111 = vpack.c.b16 %v105, %v104
    %v112 = vpack.c.b16 %v107, %v106
    %v113 = vpack.c.b16 %v109, %v108
    %v116 = vunpack.c.l.b16 %v36
    %v117 = vunpack.c.l.b16 %v37
    %v118 = vpack.c.b16 %v117, %v116
    %vm120 = vcmask 130048
    %v122 = vsel %vm120, %v110, 0
    %v125 = vsel %vm120, %v111, 0
    %v128 = vsel %vm120, %v112, 0
    %v131 = vsel %vm120, %v113, 0
    %133 = vmatprep.subr.bf16.mxu0 0
    %134 = vmatpush1.bf16.msra.mxu0 %v118
    %135 = vmatprep.subr.bf16.mxu0 0
    %136 = vmatpush1.bf16.msra.mxu0 0
    %137 = vmatprep.subr.bf16.mxu0 0
    %138 = vmatpush1.bf16.msra.mxu0 0
    %139 = vmatprep.subr.bf16.mxu0 0
    %140 = vmatpush1.bf16.msra.mxu0 0
    %141 = vmatprep.subr.bf16.mxu0 0
    %142 = vmatpush1.bf16.msra.mxu0 0
    %143 = vmatprep.subr.bf16.mxu0 0
    %144 = vmatpush1.bf16.msra.mxu0 0
    %145 = vmatprep.subr.bf16.mxu0 0
    %146 = vmatpush1.bf16.msra.mxu0 0
    %147 = vmatprep.subr.bf16.mxu0 0
    %148 = vmatpush1.bf16.msra.mxu0 0
    %149 = vmatprep.subr.bf16.mxu0 0
    %150 = vmatpush1.bf16.msra.mxu0 0
    %151 = vmatprep.subr.bf16.mxu0 0
    %152 = vmatpush1.bf16.msra.mxu0 0
    %153 = vmatprep.subr.bf16.mxu0 0
    %154 = vmatpush1.bf16.msra.mxu0 0
    %155 = vmatprep.subr.bf16.mxu0 0
    %156 = vmatpush1.bf16.msra.mxu0 0
    %157 = vmatprep.subr.bf16.mxu0 0
    %158 = vmatpush1.bf16.msra.mxu0 0
    %159 = vmatprep.subr.bf16.mxu0 0
    %160 = vmatpush1.bf16.msra.mxu0 0
    %161 = vmatprep.subr.bf16.mxu0 0
    %162 = vmatpush1.bf16.msra.mxu0 0
    %163 = vmatprep.subr.bf16.mxu0 0
    %164 = vmatpush1.bf16.msra.mxu0 0
    %165 = vmatprep.mubr.bf16.mxu0 0
    %166 = vmatmul.mubr.bf16.gmra.mrb[0].mxu0 %v122
    %v167 = vpop.f32.mrb[0].mxu0
    %v168 = vadd.f32 %v57, %v167
    %v169 = vpop.f32.mrb[0].mxu0
    %v170 = vpop.f32.mrb[0].mxu0
    %v171 = vadd.f32 %v62, %v170
    %v172 = vpop.f32.mrb[0].mxu0
    %173 = vmatprep.mubr.bf16.mxu0 0
    %174 = vmatmul.mubr.bf16.gmra.mrb[0].mxu0 %v125
    %v175 = vpop.f32.mrb[0].mxu0
    %v176 = vadd.f32 %v67, %v175
    %v177 = vpop.f32.mrb[0].mxu0
    %v178 = vpop.f32.mrb[0].mxu0
    %v179 = vadd.f32 %v72, %v178
    %v180 = vpop.f32.mrb[0].mxu0
    %181 = vmatprep.mubr.bf16.mxu0 0
    %182 = vmatmul.mubr.bf16.gmra.mrb[0].mxu0 %v128
    %v183 = vpop.f32.mrb[0].mxu0
    %v184 = vadd.f32 %v77, %v183
    %v185 = vpop.f32.mrb[0].mxu0
    %v186 = vpop.f32.mrb[0].mxu0
    %v187 = vadd.f32 %v82, %v186
    %v188 = vpop.f32.mrb[0].mxu0
    %189 = vmatprep.mubr.bf16.mxu0 0
    %190 = vmatmul.mubr.bf16.gmra.mrb[0].mxu0 %v131
    %v191 = vpop.f32.mrb[0].mxu0
    %v192 = vadd.f32 %v87, %v191
    %v193 = vpop.f32.mrb[0].mxu0
    %v194 = vpop.f32.mrb[0].mxu0
    %v195 = vadd.f32 %v92, %v194
    %v196 = vpop.f32.mrb[0].mxu0
    %197 = vdwg.mxu0
    %v198 = vmax.f32 %v168, 0.0
    %v199 = vmax.f32 %v171, 0.0
    %v200 = vmax.f32 %v176, 0.0
    %v201 = vmax.f32 %v179, 0.0
    %v202 = vmax.f32 %v184, 0.0
    %v203 = vmax.f32 %v187, 0.0
    %v204 = vmax.f32 %v192, 0.0
    %v205 = vmax.f32 %v195, 0.0
    %v206 = vpack.c.bf16 %v199, %v198
    %v207 = vpack.c.bf16 %v201, %v200
    %v208 = vpack.c.bf16 %v203, %v202
    %v209 = vpack.c.bf16 %v205, %v204
    %v210 = vld [vmem:[%s3] sm:$0xf]
    %v211 = vld [vmem:[%s3 + $0x4] sm:$0xf]
    %v212 = vld [vmem:[%s3 + $0x8] sm:$0xf]
    %v213 = vld [vmem:[%s3 + $0xc] sm:$0xf]
    %v214 = vld [vmem:[%s3 + $0x10] sm:$0xf]
    %v215 = vld [vmem:[%s3 + $0x14] sm:$0xf]
    %v216 = vld [vmem:[%s3 + $0x18] sm:$0xf]
    %v217 = vld [vmem:[%s3 + $0x1c] sm:$0xf]
    %v218 = vld [vmem:[%s3 + $0x20] sm:$0xf]
    %v219 = vld [vmem:[%s3 + $0x24] sm:$0xf]
    %v220 = vld [vmem:[%s3 + $0x28] sm:$0xf]
    %v221 = vld [vmem:[%s3 + $0x2c] sm:$0xf]
    %v222 = vld [vmem:[%s3 + $0x30] sm:$0xf]
    %v223 = vld [vmem:[%s3 + $0x34] sm:$0xf]
    %v224 = vld [vmem:[%s3 + $0x38] sm:$0xf]
    %v225 = vld [vmem:[%s3 + $0x3c] sm:$0xf]
    %v226 = vld [vmem:[%s4] sm:$0xff]
    %v227 = vld [vmem:[%s4 + $0x8] sm:$0xff]
    %v228 = vld [vmem:[%s4 + $0x10] sm:$0xff]
    %v229 = vld [vmem:[%s4 + $0x18] sm:$0xff]
    %v230 = vld [vmem:[%s4 + $0x20] sm:$0xff]
    %v231 = vld [vmem:[%s4 + $0x28] sm:$0xff]
    %v232 = vld [vmem:[%s4 + $0x30] sm:$0xff]
    %v233 = vld [vmem:[%s4 + $0x38] sm:$0xff]
    %v234 = vld [vmem:[%s4 + $0x40] sm:$0xff]
    %v235 = vld [vmem:[%s4 + $0x48] sm:$0xff]
    %v236 = vld [vmem:[%s4 + $0x50] sm:$0xff]
    %v237 = vld [vmem:[%s4 + $0x58] sm:$0xff]
    %v238 = vld [vmem:[%s4 + $0x60] sm:$0xff]
    %v239 = vld [vmem:[%s4 + $0x68] sm:$0xff]
    %v240 = vld [vmem:[%s4 + $0x70] sm:$0xff]
    %v241 = vld [vmem:[%s4 + $0x78] sm:$0xff]
    %243 = vset.pattern.permute.xlu0 0
    %244 = vperm.xlu0 %243, %v226
    %v245 = vpop.permute.xlu0 %244
    %248 = vset.pattern.permute.xlu0 0
    %249 = vperm.xlu0 %248, %v227
    %v250 = vpop.permute.xlu0 %249
    %253 = vset.pattern.permute.xlu0 0
    %254 = vperm.xlu0 %253, %v228
    %v255 = vpop.permute.xlu0 %254
    %258 = vset.pattern.permute.xlu0 0
    %259 = vperm.xlu0 %258, %v229
    %v260 = vpop.permute.xlu0 %259
    %263 = vset.pattern.permute.xlu0 0
    %264 = vperm.xlu0 %263, %v230
    %v265 = vpop.permute.xlu0 %264
    %268 = vset.pattern.permute.xlu0 0
    %269 = vperm.xlu0 %268, %v231
    %v270 = vpop.permute.xlu0 %269
    %273 = vset.pattern.permute.xlu0 0
    %274 = vperm.xlu0 %273, %v232
    %v275 = vpop.permute.xlu0 %274
    %278 = vset.pattern.permute.xlu0 0
    %279 = vperm.xlu0 %278, %v233
    %v280 = vpop.permute.xlu0 %279
    %283 = vset.pattern.permute.xlu0 0
    %284 = vperm.xlu0 %283, %v234
    %v285 = vpop.permute.xlu0 %284
    %288 = vset.pattern.permute.xlu0 0
    %289 = vperm.xlu0 %288, %v235
    %v290 = vpop.permute.xlu0 %289
    %293 = vset.pattern.permute.xlu0 0
    %294 = vperm.xlu0 %293, %v236
    %v295 = vpop.permute.xlu0 %294
    %298 = vset.pattern.permute.xlu0 0
    %299 = vperm.xlu0 %298, %v237
    %v300 = vpop.permute.xlu0 %299
    %303 = vset.pattern.permute.xlu0 0
    %304 = vperm.xlu0 %303, %v238
    %v305 = vpop.permute.xlu0 %304
    %308 = vset.pattern.permute.xlu0 0
    %309 = vperm.xlu0 %308, %v239
    %v310 = vpop.permute.xlu0 %309
    %313 = vset.pattern.permute.xlu0 0
    %314 = vperm.xlu0 %313, %v240
    %v315 = vpop.permute.xlu0 %314
    %318 = vset.pattern.permute.xlu0 0
    %319 = vperm.xlu0 %318, %v241
    %v320 = vpop.permute.xlu0 %319
    %v338 = vunpack.c.l.b16 %v210
    %v339 = vunpack.c.l.b16 %v211
    %v340 = vunpack.c.l.b16 %v212
    %v341 = vunpack.c.l.b16 %v213
    %v342 = vunpack.c.l.b16 %v214
    %v343 = vunpack.c.l.b16 %v215
    %v344 = vunpack.c.l.b16 %v216
    %v345 = vunpack.c.l.b16 %v217
    %v346 = vunpack.c.l.b16 %v218
    %v347 = vunpack.c.l.b16 %v219
    %v348 = vunpack.c.l.b16 %v220
    %v349 = vunpack.c.l.b16 %v221
    %v350 = vunpack.c.l.b16 %v222
    %v351 = vunpack.c.l.b16 %v223
    %v352 = vunpack.c.l.b16 %v224
    %v353 = vunpack.c.l.b16 %v225
    %v354 = vpack.c.b16 %v339, %v338
    %v355 = vpack.c.b16 %v341, %v340
    %v356 = vpack.c.b16 %v343, %v342
    %v357 = vpack.c.b16 %v345, %v344
    %v358 = vpack.c.b16 %v347, %v346
    %v359 = vpack.c.b16 %v349, %v348
    %v360 = vpack.c.b16 %v351, %v350
    %v361 = vpack.c.b16 %v353, %v352
    %vm362 = vcmask 523264
    %v364 = vsel %vm362, %v354, 0
    %v367 = vsel %vm362, %v355, 0
    %v370 = vsel %vm362, %v356, 0
    %v373 = vsel %vm362, %v357, 0
    %v376 = vsel %vm362, %v358, 0
    %v379 = vsel %vm362, %v359, 0
    %v382 = vsel %vm362, %v360, 0
    %v385 = vsel %vm362, %v361, 0
    %387 = vmatprep.subr.bf16.mxu0 0
    %388 = vmatpush1.bf16.msra.mxu0 %v206
    %389 = vmatprep.subr.bf16.mxu0 0
    %390 = vmatpush1.bf16.msra.mxu0 %v207
    %391 = vmatprep.subr.bf16.mxu0 0
    %392 = vmatpush1.bf16.msra.mxu0 %v208
    %393 = vmatprep.subr.bf16.mxu0 0
    %394 = vmatpush1.bf16.msra.mxu0 %v209
    %395 = vmatprep.subr.bf16.mxu0 0
    %396 = vmatpush1.bf16.msra.mxu0 0
    %397 = vmatprep.subr.bf16.mxu0 0
    %398 = vmatpush1.bf16.msra.mxu0 0
    %399 = vmatprep.subr.bf16.mxu0 0
    %400 = vmatpush1.bf16.msra.mxu0 0
    %401 = vmatprep.subr.bf16.mxu0 0
    %402 = vmatpush1.bf16.msra.mxu0 0
    %403 = vmatprep.subr.bf16.mxu0 0
    %404 = vmatpush1.bf16.msra.mxu0 0
    %405 = vmatprep.subr.bf16.mxu0 0
    %406 = vmatpush1.bf16.msra.mxu0 0
    %407 = vmatprep.subr.bf16.mxu0 0
    %408 = vmatpush1.bf16.msra.mxu0 0
    %409 = vmatprep.subr.bf16.mxu0 0
    %410 = vmatpush1.bf16.msra.mxu0 0
    %411 = vmatprep.subr.bf16.mxu0 0
    %412 = vmatpush1.bf16.msra.mxu0 0
    %413 = vmatprep.subr.bf16.mxu0 0
    %414 = vmatpush1.bf16.msra.mxu0 0
    %415 = vmatprep.subr.bf16.mxu0 0
    %416 = vmatpush1.bf16.msra.mxu0 0
    %417 = vmatprep.subr.bf16.mxu0 0
    %418 = vmatpush1.bf16.msra.mxu0 0
    %419 = vmatprep.mubr.bf16.mxu0 0
    %420 = vmatmul.mubr.bf16.gmra.mrb[0].mxu0 %v364
    %v421 = vpop.f32.mrb[0].mxu0
    %v422 = vadd.f32 %v245, %v421
    %v423 = vpop.f32.mrb[0].mxu0
    %v424 = vpop.f32.mrb[0].mxu0
    %v425 = vadd.f32 %v250, %v424
    %v426 = vpop.f32.mrb[0].mxu0
    %427 = vmatprep.mubr.bf16.mxu0 0
    %428 = vmatmul.mubr.bf16.gmra.mrb[0].mxu0 %v367
    %v429 = vpop.f32.mrb[0].mxu0
    %v430 = vadd.f32 %v255, %v429
    %v431 = vpop.f32.mrb[0].mxu0
    %v432 = vpop.f32.mrb[0].mxu0
    %v433 = vadd.f32 %v260, %v432
    %v434 = vpop.f32.mrb[0].mxu0
    %435 = vmatprep.mubr.bf16.mxu0 0
    %436 = vmatmul.mubr.bf16.gmra.mrb[0].mxu0 %v370
    %v437 = vpop.f32.mrb[0].mxu0
    %v438 = vadd.f32 %v265, %v437
    %v439 = vpop.f32.mrb[0].mxu0
    %v440 = vpop.f32.mrb[0].mxu0
    %v441 = vadd.f32 %v270, %v440
    %v442 = vpop.f32.mrb[0].mxu0
    %443 = vmatprep.mubr.bf16.mxu0 0
    %444 = vmatmul.mubr.bf16.gmra.mrb[0].mxu0 %v373
    %v445 = vpop.f32.mrb[0].mxu0
    %v446 = vadd.f32 %v275, %v445
    %v447 = vpop.f32.mrb[0].mxu0
    %v448 = vpop.f32.mrb[0].mxu0
    %v449 = vadd.f32 %v280, %v448
    %v450 = vpop.f32.mrb[0].mxu0
    %451 = vmatprep.mubr.bf16.mxu0 0
    %452 = vmatmul.mubr.bf16.gmra.mrb[0].mxu0 %v376
    %v453 = vpop.f32.mrb[0].mxu0
    %v454 = vadd.f32 %v285, %v453
    %v455 = vpop.f32.mrb[0].mxu0
    %v456 = vpop.f32.mrb[0].mxu0
    %v457 = vadd.f32 %v290, %v456
    %v458 = vpop.f32.mrb[0].mxu0
    %459 = vmatprep.mubr.bf16.mxu0 0
    %460 = vmatmul.mubr.bf16.gmra.mrb[0].mxu0 %v379
    %v461 = vpop.f32.mrb[0].mxu0
    %v462 = vadd.f32 %v295, %v461
    %v463 = vpop.f32.mrb[0].mxu0
    %v464 = vpop.f32.mrb[0].mxu0
    %v465 = vadd.f32 %v300, %v464
    %v466 = vpop.f32.mrb[0].mxu0
    %467 = vmatprep.mubr.bf16.mxu0 0
    %468 = vmatmul.mubr.bf16.gmra.mrb[0].mxu0 %v382
    %v469 = vpop.f32.mrb[0].mxu0
    %v470 = vadd.f32 %v305, %v469
    %v471 = vpop.f32.mrb[0].mxu0
    %v472 = vpop.f32.mrb[0].mxu0
    %v473 = vadd.f32 %v310, %v472
    %v474 = vpop.f32.mrb[0].mxu0
    %475 = vmatprep.mubr.bf16.mxu0 0
    %476 = vmatmul.mubr.bf16.gmra.mrb[0].mxu0 %v385
    %v477 = vpop.f32.mrb[0].mxu0
    %v478 = vadd.f32 %v315, %v477
    %v479 = vpop.f32.mrb[0].mxu0
    %v480 = vpop.f32.mrb[0].mxu0
    %v481 = vadd.f32 %v320, %v480
    %v482 = vpop.f32.mrb[0].mxu0
    %483 = vdwg.mxu0
    %v484 = vmax.f32 %v422, 0.0
    %v485 = vmax.f32 %v425, 0.0
    %v486 = vmax.f32 %v430, 0.0
    %v487 = vmax.f32 %v433, 0.0
    %v488 = vmax.f32 %v438, 0.0
    %v489 = vmax.f32 %v441, 0.0
    %v490 = vmax.f32 %v446, 0.0
    %v491 = vmax.f32 %v449, 0.0
    %v492 = vmax.f32 %v454, 0.0
    %v493 = vmax.f32 %v457, 0.0
    %v494 = vmax.f32 %v462, 0.0
    %v495 = vmax.f32 %v465, 0.0
    %v496 = vmax.f32 %v470, 0.0
    %v497 = vmax.f32 %v473, 0.0
    %v498 = vmax.f32 %v478, 0.0
    %v499 = vmax.f32 %v481, 0.0
    %v500 = vpack.c.bf16 %v485, %v484
    %v501 = vpack.c.bf16 %v487, %v486
    %v502 = vpack.c.bf16 %v489, %v488
    %v503 = vpack.c.bf16 %v491, %v490
    %v504 = vpack.c.bf16 %v493, %v492
    %v505 = vpack.c.bf16 %v495, %v494
    %v506 = vpack.c.bf16 %v497, %v496
    %v507 = vpack.c.bf16 %v499, %v498
    %v508 = vld [vmem:[%s5] sm:$0xf]
    %v509 = vld [vmem:[%s5 + $0x4] sm:$0xf]
    %v510 = vld [vmem:[%s5 + $0x8] sm:$0xf]
    %v511 = vld [vmem:[%s5 + $0xc] sm:$0xf]
    %v512 = vld [vmem:[%s5 + $0x10] sm:$0xf]
    %v513 = vld [vmem:[%s5 + $0x14] sm:$0xf]
    %v514 = vld [vmem:[%s5 + $0x18] sm:$0xf]
    %v515 = vld [vmem:[%s5 + $0x1c] sm:$0xf]
    %v516 = vld [vmem:[%s6] sm:$0xff]
    %v517 = vld [vmem:[%s6 + $0x8] sm:$0xff]
    %v518 = vld [vmem:[%s6 + $0x10] sm:$0xff]
    %v519 = vld [vmem:[%s6 + $0x18] sm:$0xff]
    %v520 = vld [vmem:[%s6 + $0x20] sm:$0xff]
    %v521 = vld [vmem:[%s6 + $0x28] sm:$0xff]
    %v522 = vld [vmem:[%s6 + $0x30] sm:$0xff]
    %v523 = vld [vmem:[%s6 + $0x38] sm:$0xff]
    %525 = vset.pattern.permute.xlu0 0
    %526 = vperm.xlu0 %525, %v516
    %v527 = vpop.permute.xlu0 %526
    %530 = vset.pattern.permute.xlu0 0
    %531 = vperm.xlu0 %530, %v517
    %v532 = vpop.permute.xlu0 %531
    %535 = vset.pattern.permute.xlu0 0
    %536 = vperm.xlu0 %535, %v518
    %v537 = vpop.permute.xlu0 %536
    %540 = vset.pattern.permute.xlu0 0
    %541 = vperm.xlu0 %540, %v519
    %v542 = vpop.permute.xlu0 %541
    %545 = vset.pattern.permute.xlu0 0
    %546 = vperm.xlu0 %545, %v520
    %v547 = vpop.permute.xlu0 %546
    %550 = vset.pattern.permute.xlu0 0
    %551 = vperm.xlu0 %550, %v521
    %v552 = vpop.permute.xlu0 %551
    %555 = vset.pattern.permute.xlu0 0
    %556 = vperm.xlu0 %555, %v522
    %v557 = vpop.permute.xlu0 %556
    %560 = vset.pattern.permute.xlu0 0
    %561 = vperm.xlu0 %560, %v523
    %v562 = vpop.permute.xlu0 %561
    %v572 = vunpack.c.l.b16 %v508
    %v573 = vunpack.c.l.b16 %v509
    %v574 = vunpack.c.l.b16 %v510
    %v575 = vunpack.c.l.b16 %v511
    %v576 = vunpack.c.l.b16 %v512
    %v577 = vunpack.c.l.b16 %v513
    %v578 = vunpack.c.l.b16 %v514
    %v579 = vunpack.c.l.b16 %v515
    %v580 = vpack.c.b16 %v573, %v572
    %v581 = vpack.c.b16 %v575, %v574
    %v582 = vpack.c.b16 %v577, %v576
    %v583 = vpack.c.b16 %v579, %v578
    %588 = vmatprep.subr.bf16.mxu0 0
    %589 = vmatpush1.bf16.msra.mxu0 %v500
    %590 = vmatprep.subr.bf16.mxu0 0
    %591 = vmatpush1.bf16.msra.mxu0 %v501
    %592 = vmatprep.subr.bf16.mxu0 0
    %593 = vmatpush1.bf16.msra.mxu0 %v502
    %594 = vmatprep.subr.bf16.mxu0 0
    %595 = vmatpush1.bf16.msra.mxu0 %v503
    %596 = vmatprep.subr.bf16.mxu0 0
    %597 = vmatpush1.bf16.msra.mxu0 %v504
    %598 = vmatprep.subr.bf16.mxu0 0
    %599 = vmatpush1.bf16.msra.mxu0 %v505
    %600 = vmatprep.subr.bf16.mxu0 0
    %601 = vmatpush1.bf16.msra.mxu0 %v506
    %602 = vmatprep.subr.bf16.mxu0 0
    %603 = vmatpush1.bf16.msra.mxu0 %v507
    %604 = vmatprep.subr.bf16.mxu0 0
    %605 = vmatpush1.bf16.msra.mxu0 0
    %606 = vmatprep.subr.bf16.mxu0 0
    %607 = vmatpush1.bf16.msra.mxu0 0
    %608 = vmatprep.subr.bf16.mxu0 0
    %609 = vmatpush1.bf16.msra.mxu0 0
    %610 = vmatprep.subr.bf16.mxu0 0
    %611 = vmatpush1.bf16.msra.mxu0 0
    %612 = vmatprep.subr.bf16.mxu0 0
    %613 = vmatpush1.bf16.msra.mxu0 0
    %614 = vmatprep.subr.bf16.mxu0 0
    %615 = vmatpush1.bf16.msra.mxu0 0
    %616 = vmatprep.subr.bf16.mxu0 0
    %617 = vmatpush1.bf16.msra.mxu0 0
    %618 = vmatprep.subr.bf16.mxu0 0
    %619 = vmatpush1.bf16.msra.mxu0 0
    %620 = vmatprep.mubr.bf16.mxu0 0
    %621 = vmatmul.mubr.bf16.gmra.mrb[0].mxu0 %v580
    %v622 = vpop.f32.mrb[0].mxu0
    %v623 = vadd.f32 %v527, %v622
    %v624 = vpop.f32.mrb[0].mxu0
    %v625 = vpop.f32.mrb[0].mxu0
    %v626 = vadd.f32 %v532, %v625
    %v627 = vpop.f32.mrb[0].mxu0
    %628 = vmatprep.mubr.bf16.mxu0 0
    %629 = vmatmul.mubr.bf16.gmra.mrb[0].mxu0 %v581
    %v630 = vpop.f32.mrb[0].mxu0
    %v631 = vadd.f32 %v537, %v630
    %v632 = vpop.f32.mrb[0].mxu0
    %v633 = vpop.f32.mrb[0].mxu0
    %v634 = vadd.f32 %v542, %v633
    %v635 = vpop.f32.mrb[0].mxu0
    %636 = vmatprep.mubr.bf16.mxu0 0
    %637 = vmatmul.mubr.bf16.gmra.mrb[0].mxu0 %v582
    %v638 = vpop.f32.mrb[0].mxu0
    %v639 = vadd.f32 %v547, %v638
    %v640 = vpop.f32.mrb[0].mxu0
    %v641 = vpop.f32.mrb[0].mxu0
    %v642 = vadd.f32 %v552, %v641
    %v643 = vpop.f32.mrb[0].mxu0
    %644 = vmatprep.mubr.bf16.mxu0 0
    %645 = vmatmul.mubr.bf16.gmra.mrb[0].mxu0 %v583
    %v646 = vpop.f32.mrb[0].mxu0
    %v647 = vadd.f32 %v557, %v646
    %v648 = vpop.f32.mrb[0].mxu0
    %v649 = vpop.f32.mrb[0].mxu0
    %v650 = vadd.f32 %v562, %v649
    %v651 = vpop.f32.mrb[0].mxu0
    %652 = vdwg.mxu0
    %v653 = vmax.f32 %v623, 0.0
    %v654 = vmax.f32 %v626, 0.0
    %v655 = vmax.f32 %v631, 0.0
    %v656 = vmax.f32 %v634, 0.0
    %v657 = vmax.f32 %v639, 0.0
    %v658 = vmax.f32 %v642, 0.0
    %v659 = vmax.f32 %v647, 0.0
    %v660 = vmax.f32 %v650, 0.0
    %v661 = vld [vmem:[%s7] sm:$0xff]
    %v662 = vld [vmem:[%s7 + $0x8] sm:$0xff]
    %v663 = vld [vmem:[%s7 + $0x10] sm:$0xff]
    %v664 = vld [vmem:[%s7 + $0x18] sm:$0xff]
    %v665 = vld [vmem:[%s7 + $0x20] sm:$0xff]
    %v666 = vld [vmem:[%s7 + $0x28] sm:$0xff]
    %v667 = vld [vmem:[%s7 + $0x30] sm:$0xff]
    %v668 = vld [vmem:[%s7 + $0x38] sm:$0xff]
    %670 = vset.pattern.permute.xlu0 0
    %671 = vperm.xlu0 %670, %v661
    %v672 = vpop.permute.xlu0 %671
    %675 = vset.pattern.permute.xlu0 0
    %676 = vperm.xlu0 %675, %v662
    %v677 = vpop.permute.xlu0 %676
    %680 = vset.pattern.permute.xlu0 0
    %681 = vperm.xlu0 %680, %v663
    %v682 = vpop.permute.xlu0 %681
    %685 = vset.pattern.permute.xlu0 0
    %686 = vperm.xlu0 %685, %v664
    %v687 = vpop.permute.xlu0 %686
    %690 = vset.pattern.permute.xlu0 0
    %691 = vperm.xlu0 %690, %v665
    %v692 = vpop.permute.xlu0 %691
    %695 = vset.pattern.permute.xlu0 0
    %696 = vperm.xlu0 %695, %v666
    %v697 = vpop.permute.xlu0 %696
    %700 = vset.pattern.permute.xlu0 0
    %701 = vperm.xlu0 %700, %v667
    %v702 = vpop.permute.xlu0 %701
    %705 = vset.pattern.permute.xlu0 0
    %706 = vperm.xlu0 %705, %v668
    %v707 = vpop.permute.xlu0 %706
    %v709 = vmul.f32 %v653, %v672
    %v710 = vmul.f32 %v654, %v677
    %v711 = vmul.f32 %v655, %v682
    %v712 = vmul.f32 %v656, %v687
    %v713 = vmul.f32 %v657, %v692
    %v714 = vmul.f32 %v658, %v697
    %v715 = vmul.f32 %v659, %v702
    %v716 = vmul.f32 %v660, %v707
    %v717 = vadd.f32 %v709, %v710
    %v718 = vadd.f32 %v717, %v711
    %v719 = vadd.f32 %v718, %v712
    %v720 = vadd.f32 %v719, %v713
    %v721 = vadd.f32 %v720, %v714
    %v722 = vadd.f32 %v721, %v715
    %v723 = vadd.f32 %v722, %v716
    %v724 = vrot.slane %v723, 4
    %v725 = vadd.f32 %v723, %v724
    %v726 = vrot.slane %v725, 2
    %v727 = vadd.f32 %v725, %v726
    %v728 = vrot.slane %v727, 1
    %v729 = vadd.f32 %v727, %v728
    %v730 = vld [vmem:[#allocation2] sm:$0x1]
    %732 = vset.pattern.permute.xlu0 0
    %733 = vperm.xlu0 %732, %v730
    %v734 = vpop.permute.xlu0 %733
    %v736 = vlaneseq
    %v737 = vshrl.u32 %v736, 7
    %v738 = vsub.s32 0, %v737
    %v739 = vrot.slane %v734, %v738
    %v740 = vadd.f32 %v729, %v739
    %741 = vst [vmem:[#allocation3] sm:$0x1] %v740
    // Predicated region
    $region38: #{tpu_custom_call.1} parent=1 // pred_check
      _
    $region39: #{tpu_custom_call.1} parent=1 // pred_check_branch
      %743 = sbr.rel (0) target = $region41
    $region40: #{tpu_custom_call.1} parent=1 // pred_region
      %s745 = ssub.s32 16, 16
      %746 = vsyncadd [#allocation4], %s745
      %s748 = sshll.u32 [#allocation3], 4
      %s749 = int_to_ptr.vmem [resolvable:$true] %s748
      %751 = dma.vmem_to_hbm [thread:$0]  %s749, 16, %s9, [#allocation4]
    $region41: #{tpu_custom_call.1} parent=1 // pred_fallthru
      _
    // Predicated region
    $region42: #{tpu_custom_call.1} parent=1 // pred_check
      _
    $region43: #{tpu_custom_call.1} parent=1 // pred_check_branch
      %753 = sbr.rel (0) target = $region45
    $region44: #{tpu_custom_call.1} parent=1 // pred_region
      %754 = dma.done [#allocation4], 16
    $region45: #{tpu_custom_call.1} parent=1 // pred_fallthru
      _
    %755 = vsyncpa [#allocation4], 1

</llo_original>
